<compile_context>
chip_gen: v5e
topology: v5e:2x2
jax: 0.10.0
libtpu: 0.0.40
codegen_flags: <defaults>
</compile_context>

<pallas_src>
import functools
import math

import jax
import jax.numpy as jnp
from jax.experimental import pallas as pl
from jax.experimental.pallas import tpu as pltpu


# ---------------------------------------------------------------------------
# pe buffer (matches the PyTorch register_buffer built in __init__)
# ---------------------------------------------------------------------------
def build_pe_table(d_model, max_len=5000, dtype=jnp.float32):
    position = jnp.arange(max_len, dtype=jnp.float32)[:, None]            # (L, 1)
    div_term = jnp.exp(jnp.arange(0, d_model, 2, dtype=jnp.float32)
                       * (-math.log(10000.0) / d_model))                  # (D/2,)
    pe = jnp.zeros((max_len, d_model), jnp.float32)
    pe = pe.at[:, 0::2].set(jnp.sin(position * div_term))
    pe = pe.at[:, 1::2].set(jnp.cos(position * div_term))
    return pe[:, None, :].astype(dtype)                                   # (L, 1, D)


# ---------------------------------------------------------------------------
# Kernel: lane-dense fused add; pe broadcast over batch along the lane axis.
# ---------------------------------------------------------------------------
def _pe_add_kernel(x_ref, pe_ref, o_ref, *, batch):
    # x_ref / o_ref : (ts, B*D)     pe_ref : (ts, D)
    pe = pe_ref[...]
    if batch > 1:
        # Row layout of x2d is [b=0: d0..D-1, b=1: d0..D-1, ...], so replicating
        # pe along lanes reproduces the broadcast over the batch dim.
        pe = jnp.concatenate([pe] * batch, axis=-1)
    o_ref[...] = x_ref[...] + pe


def _choose_seq_tile(S, B, D, itemsize, *, target_slab_bytes=4 << 20):
    """Rows per grid step, sized from bytes; rows are a multiple of the sublane tile."""
    row_mult = max(8, 32 // itemsize)                # 8 for f32, 16 for bf16, 32 for int8/fp8
    row_bytes = (2 * B * D + D) * itemsize           # x row + out row + pe row
    ts = int(target_slab_bytes // row_bytes)         # runtime double-buffers this slab
    if ts >= S:
        if S >= 2 * row_mult:
            # One giant block leaves a second TensorCore (v7x) idle: split into
            # >= 2 "parallel" grid steps, rows still sublane-aligned.
            half = (S + 1) // 2
            return min(S, -(-half // row_mult) * row_mult)
        return S                                      # single full block (block dim == array dim)
    ts = max(row_mult, (ts // row_mult) * row_mult)
    return min(ts, S)


def positional_encoding_forward(x, pe, *, target_slab_bytes=4 << 20, donate_x=False):
    """x: (S, B, D), pe: (max_len, 1, D) with max_len >= S  ->  x + pe[:S].

    Dropout(p=0.1) of the reference module is identity in eval mode.
    """
    S, B, D = x.shape
    assert pe.shape[0] >= S and pe.shape[1] == 1 and pe.shape[2] == D

    x2d = x.reshape(S, B * D)                        # free reshape (contiguous dims)
    pe2d = pe[:S, 0, :].astype(x.dtype)              # (S, D); cast to activation dtype once

    ts = _choose_seq_tile(S, B, D, jnp.dtype(x.dtype).itemsize,
                          target_slab_bytes=target_slab_bytes)
    grid = (pl.cdiv(S, ts),)

    out2d = pl.pallas_call(
        functools.partial(_pe_add_kernel, batch=B),
        out_shape=jax.ShapeDtypeStruct((S, B * D), x.dtype),
        grid=grid,
        in_specs=[
            pl.BlockSpec((ts, B * D), lambda i: (i, 0)),   # x: lane-dense rows
            pl.BlockSpec((ts, D), lambda i: (i, 0)),       # pe indexed by the sequence dim
        ],
        out_specs=pl.BlockSpec((ts, B * D), lambda i: (i, 0)),
        input_output_aliases=({0: 0} if donate_x else {}),
        compiler_params=pltpu.CompilerParams(dimension_semantics=("parallel",)),
    )(x2d, pe2d)
    return out2d.reshape(S, B, D)


# TODO(synk): training-mode nn.Dropout(p=0.1) (stochastic mask + 1/(1-p) scale)
# is not implemented; eval-mode forward (identity dropout) is reproduced exactly.


if __name__ == "__main__":
    # Small shapes consistent with the module: seq=8, batch=2, d_model=256.
    S, B, D = 8, 2, 256
    MAX_LEN = 5000                      # PyTorch default max_len

    key = jax.random.PRNGKey(0)
    x = jax.random.normal(key, (S, B, D), dtype=jnp.float32)
    pe = build_pe_table(D, MAX_LEN)

    y = jax.block_until_ready(jax.jit(positional_encoding_forward)(x, pe))
    ref = x + pe[:S].astype(x.dtype)
    assert y.shape == (S, B, D), y.shape
    assert bool(jnp.all(jnp.isfinite(y)))
    assert bool(jnp.allclose(y, ref, atol=1e-6, rtol=1e-6))

    # Slightly larger bf16 case: exercises the multi-step tiled path and the
    # pe -> activation-dtype cast (whole add runs in bf16).
    S2, B2 = 40, 2
    x2 = jax.random.normal(jax.random.PRNGKey(1), (S2, B2, D), dtype=jnp.bfloat16)
    y2 = jax.block_until_ready(jax.jit(positional_encoding_forward)(x2, pe))
    ref2 = x2 + pe[:S2].astype(jnp.bfloat16)
    assert y2.shape == (S2, B2, D), y2.shape
    assert bool(jnp.allclose(y2.astype(jnp.float32), ref2.astype(jnp.float32),
                             atol=1e-2, rtol=1e-2))

    print("KERNEL_OK")
</pallas_src>

<mosaic_0001>
module attributes {stable_mosaic.version = 11 : i64} {
  func.func @_pe_add_kernel(%arg0: i32, %arg1: memref<8x512xf32, #tpu.memory_space<vmem>>, %arg2: memref<8x256xf32, #tpu.memory_space<vmem>>, %arg3: memref<8x512xf32, #tpu.memory_space<vmem>>) attributes {dimension_semantics = [#tpu.dimension_semantics<parallel>], iteration_bounds = array<i64: 1>, scalar_prefetch = 0 : i64, scratch_operands = 0 : i64, tpu.core_type = #tpu.core_type<tc>, window_params = [{transform_indices = @transform_0, window_bounds = array<i64: 8, 512>}, {transform_indices = @transform_1, window_bounds = array<i64: 8, 256>}, {transform_indices = @transform_2, window_bounds = array<i64: 8, 512>}]} {
    %c0 = arith.constant 0 : index
    %c0_0 = arith.constant 0 : index
    %0 = vector.load %arg2[%c0, %c0_0] : memref<8x256xf32, #tpu.memory_space<vmem>>, vector<8x256xf32>
    %1 = tpu.concatenate %0, %0 in 1 : vector<8x256xf32>, vector<8x256xf32> -> vector<8x512xf32>
    %c0_1 = arith.constant 0 : index
    %c0_2 = arith.constant 0 : index
    %2 = vector.load %arg1[%c0_1, %c0_2] : memref<8x512xf32, #tpu.memory_space<vmem>>, vector<8x512xf32>
    %3 = arith.addf %2, %1 : vector<8x512xf32>
    %c0_3 = arith.constant 0 : index
    %c0_4 = arith.constant 0 : index
    %4 = vector.load %arg3[%c0_3, %c0_4] : memref<8x512xf32, #tpu.memory_space<vmem>>, vector<8x512xf32>
    tpu.vector_store %arg3[%c0_3, %c0_4], %3 {strides = array<i32>} : memref<8x512xf32, #tpu.memory_space<vmem>>, vector<8x512xf32>,
    return
  }
  func.func @transform_0(%arg0: i32) -> (i32, i32) {
    %c0_i32 = arith.constant 0 : i32
    %c0_i32_0 = arith.constant 0 : i32
    return %arg0, %c0_i32 : i32, i32
  }
  func.func @transform_1(%arg0: i32) -> (i32, i32) {
    %c0_i32 = arith.constant 0 : i32
    %c0_i32_0 = arith.constant 0 : i32
    return %arg0, %c0_i32 : i32, i32
  }
  func.func @transform_2(%arg0: i32) -> (i32, i32) {
    %c0_i32 = arith.constant 0 : i32
    %c0_i32_0 = arith.constant 0 : i32
    return %arg0, %c0_i32 : i32, i32
  }
}

</mosaic_0001>

<llo_original>
// kernel: positional_encoding_forward.1
$region0: #{positional_encoding_forward.1}
  #allocation0 [shape = 'u32[]', space=smem, size = 0x4, offset = 0x4, fixed_abs, tag = 'smem constant byte address 0x4 - core index']
  #allocation1 [shape = 'u32[72,128]{1,0:T(1,128)}', space=vmem, size = 0x9000, scoped, tag = 'internal scratch']
  %s0 = inlined_call_operand.vmem [shape: f32[8,512], index: 0, kind: input, shape index: {}]
  %s1 = inlined_call_operand.vmem [shape: f32[8,256], index: 1, kind: input, shape index: {}]
  %s2 = inlined_call_operand.vmem [shape: f32[8,512], index: 2, kind: output, shape index: {}]
  %s3 = sld [smem:[#allocation0]]
  $region18: #{positional_encoding_forward.1} parent=0
    _
  %s5 = ssub.s32 1, %s3
  %s6 = scalar_select 0, %s5, %s3
  // Predicated region
  $region2: #{positional_encoding_forward.1} parent=0 // pred_check
    _
  $region3: #{positional_encoding_forward.1} parent=0 // pred_check_branch
    %8 = sbr.rel (0) target = $region5
  $region4: #{positional_encoding_forward.1} parent=0 // pred_region
    _
  $region5: #{positional_encoding_forward.1} parent=0 // pred_fallthru
    _
  // Predicated region
  $region6: #{positional_encoding_forward.1} parent=0 // pred_check
    _
  $region7: #{positional_encoding_forward.1} parent=0 // pred_check_branch
    %10 = sbr.rel (0) target = $region9
  $region8: #{positional_encoding_forward.1} parent=0 // pred_region
    _
  $region9: #{positional_encoding_forward.1} parent=0 // pred_fallthru
    _
  %v11 = vld [vmem:[%s1] sm:$0xff]
  %v12 = vld [vmem:[%s1 + $0x8] sm:$0xff]
  %v13 = vld [vmem:[%s0] sm:$0xff]
  %v14 = vld [vmem:[%s0 + $0x8] sm:$0xff]
  %v15 = vld [vmem:[%s0 + $0x10] sm:$0xff]
  %v16 = vld [vmem:[%s0 + $0x18] sm:$0xff]
  %v17 = vadd.f32 %v13, %v11
  %v18 = vadd.f32 %v14, %v12
  %v19 = vadd.f32 %v15, %v11
  %v20 = vadd.f32 %v16, %v12
  %21 = vst [vmem:[%s2] sm:$0xff] %v17
  %22 = vst [vmem:[%s2 + $0x8] sm:$0xff] %v18
  %23 = vst [vmem:[%s2 + $0x10] sm:$0xff] %v19
  %24 = vst [vmem:[%s2 + $0x18] sm:$0xff] %v20
  // Predicated region
  $region10: #{positional_encoding_forward.1} parent=0 // pred_check
    _
  $region11: #{positional_encoding_forward.1} parent=0 // pred_check_branch
    %26 = sbr.rel (0) target = $region13
  $region12: #{positional_encoding_forward.1} parent=0 // pred_region
    _
  $region13: #{positional_encoding_forward.1} parent=0 // pred_fallthru
    _
  // Predicated region
  $region14: #{positional_encoding_forward.1} parent=0 // pred_check
    _
  $region15: #{positional_encoding_forward.1} parent=0 // pred_check_branch
    %28 = sbr.rel (0) target = $region17
  $region16: #{positional_encoding_forward.1} parent=0 // pred_region
    _
  $region17: #{positional_encoding_forward.1} parent=0 // pred_fallthru
    _

</llo_original>
